<compile_context>
chip_gen: v7x
topology: tpu7x:2x2x1
jax: 0.10.0
libtpu: 0.0.40
codegen_flags: <defaults>
</compile_context>

<pallas_src>
import functools

import jax
import jax.numpy as jnp
from jax import lax
from jax.experimental import pallas as pl
from jax.experimental.pallas import tpu as pltpu

EPS = 1e-12  # same eps as torch.nn.functional.normalize default


# ----------------------------------------------------------------------------
# Fused kernel: row-wise L2 normalize + Gaussian-fit partials.
# Outputs: normalized rows (N, D), sum over rows (1, D), x^T x (D, D).
# sum / xtx outputs have constant index maps -> they stay resident in VMEM
# across the ("arbitrary") reduction grid and are written back once.
# ----------------------------------------------------------------------------
def _norm_fit_kernel(x_ref, xn_ref, sum_ref, xtx_ref, *, n_total):
    i = pl.program_id(0)

    @pl.when(i == 0)
    def _():
        sum_ref[...] = jnp.zeros_like(sum_ref)
        xtx_ref[...] = jnp.zeros_like(xtx_ref)

    x = x_ref[...].astype(jnp.float32)
    br = x.shape[0]

    # Mask rows past the logical end of the array (tail of the last block).
    row_ids = lax.broadcasted_iota(jnp.int32, (br, 1), 0) + i * br
    valid = row_ids < n_total
    x = jnp.where(valid, x, 0.0)

    # F.normalize(p=2, dim=1): x / max(||x||, eps)  ==  x * rsqrt(max(||x||^2, eps^2))
    sumsq = jnp.sum(x * x, axis=-1, keepdims=True)
    xn = x * lax.rsqrt(jnp.maximum(sumsq, EPS * EPS))  # padded rows stay 0

    xn_ref[...] = xn.astype(xn_ref.dtype)
    sum_ref[...] += jnp.sum(xn, axis=0, keepdims=True)
    # x^T x, contracting over the row axis (no explicit transpose).
    xtx_ref[...] += lax.dot_general(
        xn, xn, dimension_numbers=(((0,), (0,)), ((), ())),
        preferred_element_type=jnp.float32)


def _pick_block_rows(n_rows, d, requested=512, budget_bytes=8 * 1024 * 1024):
    """Largest row tile <= `requested` that keeps double-buffered in+out blocks
    within `budget_bytes` (the D x D accumulator is resident and counted
    separately by the vmem limit)."""
    per_row = 2 * 2 * d * 4          # input + xn output, double-buffered, f32
    max_rows = max(8, budget_bytes // max(per_row, 1))
    padded_rows = -(-n_rows // 8) * 8
    br = min(requested, max_rows, padded_rows)
    return max(8, (br // 8) * 8)


def fused_normalize_fit(x, *, block_rows=512):
    """Returns (x_normalized, row_sum (1, D), x^T x (D, D)) in float32."""
    n, d = x.shape
    br = _pick_block_rows(n, d, block_rows)
    grid = pl.cdiv(n, br)
    kern = functools.partial(_norm_fit_kernel, n_total=n)
    xn, s, xtx = pl.pallas_call(
        kern,
        out_shape=(
            jax.ShapeDtypeStruct((n, d), jnp.float32),
            jax.ShapeDtypeStruct((1, d), jnp.float32),
            jax.ShapeDtypeStruct((d, d), jnp.float32),
        ),
        grid_spec=pltpu.PrefetchScalarGridSpec(
            num_scalar_prefetch=0,
            grid=(grid,),
            in_specs=[pl.BlockSpec((br, d), lambda i: (i, 0))],
            out_specs=(
                pl.BlockSpec((br, d), lambda i: (i, 0)),
                pl.BlockSpec((1, d), lambda i: (0, 0)),
                pl.BlockSpec((d, d), lambda i: (0, 0)),
            ),
        ),
        compiler_params=pltpu.CompilerParams(
            dimension_semantics=("arbitrary",),       # reduction axis
            vmem_limit_bytes=32 * 1024 * 1024,        # safe on v5e/v6e/v7x
        ),
    )(x)
    return xn, s, xtx


def _finalize_gaussian(row_sum, xtx, n_total):
    """mean + unbiased sample covariance from (sum, x^T x) partials."""
    n = float(n_total)
    mean = row_sum[0] / n
    if n_total > 1:
        cov = (xtx - n * jnp.outer(mean, mean)) / (n - 1.0)
    else:
        cov = jnp.zeros_like(xtx)   # guard the N==1 degenerate case
    return mean, cov


# ----------------------------------------------------------------------------
# training_epoch (with_dne=True, eval_classifier='density') re-implemented
# around the fused Pallas kernel.
# ----------------------------------------------------------------------------
def training_epoch_with_dne(one_epoch_embeds, task_wise_mean, task_wise_cov,
                            task_wise_train_data_nums, t, key):
    # torch.cat(one_epoch_embeds); F.normalize(p=2, dim=1); density.fit(...)
    embeds_raw = jnp.concatenate(one_epoch_embeds, axis=0)
    _, s_cur, xtx_cur = fused_normalize_fit(embeds_raw)
    n_cur = embeds_raw.shape[0]
    mean, cov = _finalize_gaussian(s_cur, xtx_cur, n_cur)

    if len(task_wise_mean) < t + 1:
        task_wise_mean.append(mean)
        task_wise_cov.append(cov)
    else:
        task_wise_mean[-1] = mean
        task_wise_cov[-1] = cov

    if t == 0:
        return mean, cov

    # Replay: np.random.multivariate_normal for past tasks (plain-JAX glue,
    # sampling has no Pallas hot path worth writing).
    sampled = []
    for i in range(t):
        key, sub = jax.random.split(key)
        past = jax.random.multivariate_normal(
            sub, task_wise_mean[i], task_wise_cov[i],
            shape=(task_wise_train_data_nums[i],), method="svd")
        sampled.append(past.astype(jnp.float32))
    sampled = jnp.concatenate(sampled, axis=0)

    # for_eval fit: F.normalize is idempotent on the already-normalized
    # current-task rows, so only the sampled rows go through the kernel and
    # the (sum, x^T x) partials are combined — no re-read of current embeds.
    _, s_past, xtx_past = fused_normalize_fit(sampled)
    n_eval = n_cur + sampled.shape[0]
    eval_mean, eval_cov = _finalize_gaussian(
        s_cur + s_past, xtx_cur + xtx_past, n_eval)
    return eval_mean, eval_cov


# ----------------------------------------------------------------------------
if __name__ == "__main__":
    key = jax.random.PRNGKey(0)
    D = 32          # embedding dim
    B = 8           # per-batch embeddings collected during one epoch
    t = 1           # current task index (so one past task exists)

    k0, k1, k2, k3, kmvn = jax.random.split(key, 5)
    one_epoch_embeds = [
        jax.random.normal(k0, (B, D), jnp.float32),
        jax.random.normal(k1, (B, D), jnp.float32),
    ]

    # previously stored task-0 statistics, also produced with the kernel
    past_raw = jax.random.normal(k2, (B, D), jnp.float32)
    _, s0, x0 = fused_normalize_fit(past_raw)
    m0, c0 = _finalize_gaussian(s0, x0, past_raw.shape[0])
    task_wise_mean = [m0]
    task_wise_cov = [c0]
    task_wise_train_data_nums = [B, 2 * B]

    eval_mean, eval_cov = training_epoch_with_dne(
        one_epoch_embeds, task_wise_mean, task_wise_cov,
        task_wise_train_data_nums, t, kmvn)
    jax.block_until_ready((eval_mean, eval_cov))

    # ---- sanity checks against a plain-JAX reference -----------------------
    def ref_norm(x):
        return x / jnp.maximum(jnp.linalg.norm(x, axis=1, keepdims=True), EPS)

    # (1) fused normalize+fit of the current-task embeds
    cat = jnp.concatenate(one_epoch_embeds, axis=0)
    xn_got, s_got, xtx_got = fused_normalize_fit(cat)
    m_got, c_got = _finalize_gaussian(s_got, xtx_got, cat.shape[0])
    xr = ref_norm(cat)
    assert jnp.allclose(xn_got, xr, atol=1e-5)
    assert jnp.allclose(m_got, xr.mean(axis=0), atol=1e-5)
    assert jnp.allclose(c_got, jnp.cov(xr, rowvar=False), atol=1e-5)

    # (2) partial-combining + tail masking (odd row count, not multiple of 8)
    a = jax.random.normal(k3, (13, D), jnp.float32)
    b = past_raw
    _, sa, xa = fused_normalize_fit(a)
    _, sb, xb = fused_normalize_fit(b)
    m_c, c_c = _finalize_gaussian(sa + sb, xa + xb, a.shape[0] + b.shape[0])
    full_ref = ref_norm(jnp.concatenate([a, b], axis=0))
    assert jnp.allclose(m_c, full_ref.mean(axis=0), atol=1e-5)
    assert jnp.allclose(c_c, jnp.cov(full_ref, rowvar=False), atol=1e-5)

    # TODO(synk): `density.fit` is modeled as a Gaussian (mean + unbiased cov);
    # the concrete `density` object / optimizer / scheduler are injected at
    # runtime in the torch code and have no Pallas equivalent.
    print("KERNEL_OK")
</pallas_src>

<mosaic_0001>
module attributes {stable_mosaic.version = 11 : i64} {
  func.func @_norm_fit_kernel(%arg0: i32, %arg1: memref<8x32xf32, #tpu.memory_space<vmem>>, %arg2: memref<8x32xf32, #tpu.memory_space<vmem>>, %arg3: memref<1x32xf32, #tpu.memory_space<vmem>>, %arg4: memref<32x32xf32, #tpu.memory_space<vmem>>) attributes {dimension_semantics = [#tpu.dimension_semantics<arbitrary>], iteration_bounds = array<i64: 1>, scalar_prefetch = 0 : i64, scratch_operands = 0 : i64, tpu.core_type = #tpu.core_type<tc>, window_params = [{transform_indices = @transform_0, window_bounds = array<i64: 8, 32>}, {transform_indices = @transform_1, window_bounds = array<i64: 8, 32>}, {pipeline_mode = #tpu.pipeline_mode<synchronous>, transform_indices = @transform_2, window_bounds = array<i64: 1, 32>}, {pipeline_mode = #tpu.pipeline_mode<synchronous>, transform_indices = @transform_3, window_bounds = array<i64: 32, 32>}]} {
    %c0_i32 = arith.constant 0 : i32
    %0 = arith.cmpi eq, %arg0, %c0_i32 : i32
    %1 = arith.extui %0 : i1 to i32
    %c0_i32_0 = arith.constant 0 : i32
    %2 = arith.cmpi ne, %1, %c0_i32_0 : i32
    scf.if %2 {
      %cst_17 = arith.constant 0.000000e+00 : f32
      %32 = vector.broadcast %cst_17 : f32 to vector<1x32xf32>
      %c0_18 = arith.constant 0 : index
      %c0_19 = arith.constant 0 : index
      %33 = vector.load %arg3[%c0_18, %c0_19] : memref<1x32xf32, #tpu.memory_space<vmem>>, vector<1x32xf32>
      tpu.vector_store %arg3[%c0_18, %c0_19], %32 {strides = array<i32>} : memref<1x32xf32, #tpu.memory_space<vmem>>, vector<1x32xf32>,
      %cst_20 = arith.constant 0.000000e+00 : f32
      %34 = vector.broadcast %cst_20 : f32 to vector<32x32xf32>
      %c0_21 = arith.constant 0 : index
      %c0_22 = arith.constant 0 : index
      %35 = vector.load %arg4[%c0_21, %c0_22] : memref<32x32xf32, #tpu.memory_space<vmem>>, vector<32x32xf32>
      tpu.vector_store %arg4[%c0_21, %c0_22], %34 {strides = array<i32>} : memref<32x32xf32, #tpu.memory_space<vmem>>, vector<32x32xf32>,
    } else {
    }
    %c0 = arith.constant 0 : index
    %c0_1 = arith.constant 0 : index
    %3 = vector.load %arg1[%c0, %c0_1] : memref<8x32xf32, #tpu.memory_space<vmem>>, vector<8x32xf32>
    %4 = tpu.iota {dimensions = array<i32: 0>} : vector<8x1xi32>
    %c8_i32 = arith.constant 8 : i32
    %5 = arith.muli %arg0, %c8_i32 : i32
    %6 = vector.broadcast %5 : i32 to vector<8x1xi32>
    %7 = arith.addi %4, %6 : vector<8x1xi32>
    %c8_i32_2 = arith.constant 8 : i32
    %8 = vector.broadcast %c8_i32_2 : i32 to vector<8x1xi32>
    %9 = arith.cmpi slt, %7, %8 : vector<8x1xi32>
    %cst = arith.constant 0.000000e+00 : f32
    %10 = vector.shape_cast %9 : vector<8x1xi1> to vector<8x1xi1>
    %11 = vector.broadcast %10 : vector<8x1xi1> to vector<8x32xi1>
    %12 = vector.broadcast %cst : f32 to vector<8x32xf32>
    %13 = arith.select %11, %3, %12 : vector<8x32xi1>, vector<8x32xf32>
    %14 = arith.mulf %13, %13 : vector<8x32xf32>
    %cst_3 = arith.constant dense<0.000000e+00> : vector<8xf32>
    %15 = vector.multi_reduction <add>, %14, %cst_3 [1] : vector<8x32xf32> to vector<8xf32>
    %16 = vector.shape_cast %15 : vector<8xf32> to vector<8x1xf32>
    %cst_4 = arith.constant 1.000000e-24 : f32
    %17 = vector.broadcast %cst_4 : f32 to vector<8x1xf32>
    %18 = arith.maximumf %16, %17 : vector<8x1xf32>
    %19 = math.rsqrt %18 : vector<8x1xf32>
    %20 = vector.broadcast %19 : vector<8x1xf32> to vector<8x32xf32>
    %21 = arith.mulf %13, %20 : vector<8x32xf32>
    %c0_5 = arith.constant 0 : index
    %c0_6 = arith.constant 0 : index
    %22 = vector.load %arg2[%c0_5, %c0_6] : memref<8x32xf32, #tpu.memory_space<vmem>>, vector<8x32xf32>
    tpu.vector_store %arg2[%c0_5, %c0_6], %21 {strides = array<i32>} : memref<8x32xf32, #tpu.memory_space<vmem>>, vector<8x32xf32>,
    %c0_7 = arith.constant 0 : index
    %c0_8 = arith.constant 0 : index
    %23 = vector.load %arg3[%c0_7, %c0_8] : memref<1x32xf32, #tpu.memory_space<vmem>>, vector<1x32xf32>
    %cst_9 = arith.constant dense<0.000000e+00> : vector<32xf32>
    %24 = vector.multi_reduction <add>, %21, %cst_9 [0] : vector<8x32xf32> to vector<32xf32>
    %25 = vector.shape_cast %24 : vector<32xf32> to vector<1x32xf32>
    %26 = arith.addf %23, %25 : vector<1x32xf32>
    %c0_10 = arith.constant 0 : index
    %c0_11 = arith.constant 0 : index
    %27 = vector.load %arg3[%c0_10, %c0_11] : memref<1x32xf32, #tpu.memory_space<vmem>>, vector<1x32xf32>
    tpu.vector_store %arg3[%c0_10, %c0_11], %26 {strides = array<i32>} : memref<1x32xf32, #tpu.memory_space<vmem>>, vector<1x32xf32>,
    %c0_12 = arith.constant 0 : index
    %c0_13 = arith.constant 0 : index
    %28 = vector.load %arg4[%c0_12, %c0_13] : memref<32x32xf32, #tpu.memory_space<vmem>>, vector<32x32xf32>
    %cst_14 = arith.constant dense<0.000000e+00> : vector<32x32xf32>
    %29 = tpu.matmul %21, %21, %cst_14 {dimension_numbers = #tpu.dot_dimension_numbers<[0], [0], [1], [1], [0, 1, 1, 1], [], []>} : vector<8x32xf32>, vector<8x32xf32>, vector<32x32xf32> -> vector<32x32xf32>
    %30 = arith.addf %28, %29 : vector<32x32xf32>
    %c0_15 = arith.constant 0 : index
    %c0_16 = arith.constant 0 : index
    %31 = vector.load %arg4[%c0_15, %c0_16] : memref<32x32xf32, #tpu.memory_space<vmem>>, vector<32x32xf32>
    tpu.vector_store %arg4[%c0_15, %c0_16], %30 {strides = array<i32>} : memref<32x32xf32, #tpu.memory_space<vmem>>, vector<32x32xf32>,
    return
  }
  func.func @transform_0(%arg0: i32) -> (i32, i32) {
    %c0_i32 = arith.constant 0 : i32
    %c0_i32_0 = arith.constant 0 : i32
    return %arg0, %c0_i32 : i32, i32
  }
  func.func @transform_1(%arg0: i32) -> (i32, i32) {
    %c0_i32 = arith.constant 0 : i32
    %c0_i32_0 = arith.constant 0 : i32
    return %arg0, %c0_i32 : i32, i32
  }
  func.func @transform_2(%arg0: i32) -> (i32, i32) {
    %c0_i32 = arith.constant 0 : i32
    %c0_i32_0 = arith.constant 0 : i32
    %c0_i32_1 = arith.constant 0 : i32
    return %c0_i32, %c0_i32_0 : i32, i32
  }
  func.func @transform_3(%arg0: i32) -> (i32, i32) {
    %c0_i32 = arith.constant 0 : i32
    %c0_i32_0 = arith.constant 0 : i32
    %c0_i32_1 = arith.constant 0 : i32
    return %c0_i32, %c0_i32_0 : i32, i32
  }
}

</mosaic_0001>

<llo_original>
// kernel: tpu_custom_call.1
$region0: #{tpu_custom_call.1}
  #allocation0 [shape = 'u32[]', space=smem, size = 0x4, offset = 0x4, fixed_abs, tag = 'smem constant byte address 0x4 - core index']
  #allocation1 [shape = 'u32[144,128]{1,0:T(1,128)}', space=vmem, size = 0x12000, scoped, tag = 'internal scratch']
  %s0 = inlined_call_operand.hbm [shape: f32[8,32], index: 0, kind: input, shape index: {}]
  %s1 = inlined_call_operand.hbm [shape: f32[8,32], index: 1, kind: output, shape index: {0}]
  %s2 = inlined_call_operand.hbm [shape: f32[1,32], index: 2, kind: output, shape index: {1}]
  %s3 = inlined_call_operand.hbm [shape: f32[32,32], index: 3, kind: output, shape index: {2}]
  %4 = xla_tuple %s1, %s2, %s3
  %s5 = sld [smem:[#allocation0]]
  $region38: #{tpu_custom_call.1} parent=0
    _
  %s7 = ssub.s32 1, %s5
  %s8 = scalar_select 0, %s7, %s5
  $region1: #{tpu_custom_call.1} parent=0
    #allocation2 [shape = 'u8[4096]{0}', space=vmem, size = 0x1000, scoped, tag = 'input window, operand 0, single buffered']
    #allocation3 [shape = 's32[1]{0}', space=sflag, size = 0x4, scoped, tag = 'scoped memory for tpu_custom_call.1']
    #allocation4 [shape = 's32[1]{0}', space=sflag, size = 0x4, scoped, tag = 'scoped memory for tpu_custom_call.1']
    #allocation5 [shape = 'u8[4096]{0}', space=vmem, size = 0x1000, scoped, tag = 'output window, operand 0, single buffered']
    #allocation6 [shape = 'u8[512]{0}', space=vmem, size = 0x400, scoped, tag = 'output window, operand 1, single buffered']
    #allocation7 [shape = 's32[1]{0}', space=sflag, size = 0x4, scoped, tag = 'scoped memory for tpu_custom_call.1']
    #allocation8 [shape = 'u8[16384]{0}', space=vmem, size = 0x4000, scoped, tag = 'output window, operand 2, single buffered']
    %9 = vsyncpa [#allocation3], 0
    %10 = vsyncpa [#allocation4], 0
    %11 = vsyncpa [#allocation7], 0
    // Predicated region
    $region2: #{tpu_custom_call.1} parent=1 // pred_check
      _
    $region3: #{tpu_custom_call.1} parent=1 // pred_check_branch
      %13 = sbr.rel (0) target = $region5
    $region4: #{tpu_custom_call.1} parent=1 // pred_region
      %s15 = ssub.s32 128, 128
      %16 = vsyncadd [#allocation3], %s15
      %s18 = sshll.u32 [#allocation2], 4
      %s19 = int_to_ptr.vmem [resolvable:$true] %s18
      %21 = dma.hbm_to_vmem [thread:$0]  %s0, 128, %s19, [#allocation3]
    $region5: #{tpu_custom_call.1} parent=1 // pred_fallthru
      _
    // Predicated region
    $region6: #{tpu_custom_call.1} parent=1 // pred_check
      _
    $region7: #{tpu_custom_call.1} parent=1 // pred_check_branch
      %23 = sbr.rel (0) target = $region9
    $region8: #{tpu_custom_call.1} parent=1 // pred_region
      %24 = dma.done [#allocation3], 128
    $region9: #{tpu_custom_call.1} parent=1 // pred_fallthru
      _
    %p25 = scmp.eq.s32.totalorder 0, 0
    // Predicated region
    $region10: #{tpu_custom_call.1} parent=1 // pred_check
      %p26 = pneg %p25
    $region11: #{tpu_custom_call.1} parent=1 // pred_check_branch
      %28 = sbr.rel (%p26) target = $region13
    $region12: #{tpu_custom_call.1} parent=1 // pred_region
      %vm29 = vcmask 253952
      %30 = vst.msk [vmem:[#allocation6] sm:$0x1] %vm29, 0.0
      %vm31 = vcmask 261120
      %32 = vst.msk [vmem:[#allocation8] sm:$0xff] %vm31, 0.0
      %33 = vst.msk [vmem:[#allocation8 + $0x8] sm:$0xff] %vm31, 0.0
      %34 = vst.msk [vmem:[#allocation8 + $0x10] sm:$0xff] %vm31, 0.0
      %35 = vst.msk [vmem:[#allocation8 + $0x18] sm:$0xff] %vm31, 0.0
    $region13: #{tpu_custom_call.1} parent=1 // pred_fallthru
      _
    %v36 = vld [vmem:[#allocation2] sm:$0xff]
    %v37 = vlaneseq
    %v38 = vshrl.u32 %v37, 7
    %s39 = smul.u32 0, 8
    %v40 = vstv %s39
    %v41 = vadd.s32 %v38, %v40
    %vm42 = vcmp.lt.s32.totalorder %v41, 8
    %v43 = vsel %vm42, 1, 0
    %vm44 = vcmp.eq.s32.totalorder %v43, 1
    %v45 = vsel %vm44, %v36, 0.0
    %v46 = vmul.f32 %v45, %v45
    %vm47 = vcmask 261120
    %v48 = vsel %vm47, %v46, 0.0
    %49 = vadd.xlane.f32.xlu0 %v48
    %v50 = vpop.xlane.xlu0 %49
    %v51 = vmax.f32 %v50, 1e-24
    %v52 = vrsqrt.pop %v51
    %v53 = vmul.f32 %v45, %v52
    %54 = vst.msk [vmem:[#allocation5] sm:$0xff] %vm47, %v53
    %v55 = vld [vmem:[#allocation6] sm:$0x1]
    %v56 = vsel %vm47, %v53, 0.0
    %v57 = vrot.slane %v56, 4
    %v58 = vadd.f32 %v56, %v57
    %v59 = vrot.slane %v58, 2
    %v60 = vadd.f32 %v58, %v59
    %v61 = vrot.slane %v60, 1
    %v62 = vadd.f32 %v60, %v61
    %v63 = vadd.f32 %v55, %v62
    %vm64 = vcmask 253952
    %65 = vst.msk [vmem:[#allocation6] sm:$0x1] %vm64, %v63
    %v66 = vld [vmem:[#allocation8] sm:$0xff]
    %v67 = vld [vmem:[#allocation8 + $0x8] sm:$0xff]
    %v68 = vld [vmem:[#allocation8 + $0x10] sm:$0xff]
    %v69 = vld [vmem:[#allocation8 + $0x18] sm:$0xff]
    %70 = vxpose.xlu0.b32.start [1/16] %v53, 128
    %71 = vxpose.xlu0.b32.cont [2/16] 0.0, 128
    %72 = vxpose.xlu0.b32.cont [3/16] 0.0, 128
    %73 = vxpose.xlu0.b32.cont [4/16] 0.0, 128
    %74 = vxpose.xlu0.b32.cont [5/16] 0.0, 128
    %75 = vxpose.xlu0.b32.cont [6/16] 0.0, 128
    %76 = vxpose.xlu0.b32.cont [7/16] 0.0, 128
    %77 = vxpose.xlu0.b32.cont [8/16] 0.0, 128
    %78 = vxpose.xlu0.b32.cont [9/16] 0.0, 128
    %79 = vxpose.xlu0.b32.cont [10/16] 0.0, 128
    %80 = vxpose.xlu0.b32.cont [11/16] 0.0, 128
    %81 = vxpose.xlu0.b32.cont [12/16] 0.0, 128
    %82 = vxpose.xlu0.b32.cont [13/16] 0.0, 128
    %83 = vxpose.xlu0.b32.cont [14/16] 0.0, 128
    %84 = vxpose.xlu0.b32.cont [15/16] 0.0, 128
    %85 = vxpose.xlu0.b32.end [16/16] 0.0, 128
    %v86 = vpop.trf.xlu0
    %v87 = vpop.trf.xlu0
    %v88 = vpop.trf.xlu0
    %v89 = vpop.trf.xlu0
    %v90 = vpop.trf.xlu0
    %v91 = vpop.trf.xlu0
    %v92 = vpop.trf.xlu0
    %v93 = vpop.trf.xlu0
    %v94 = vpop.trf.xlu0
    %v95 = vpop.trf.xlu0
    %v96 = vpop.trf.xlu0
    %v97 = vpop.trf.xlu0
    %v98 = vpop.trf.xlu0
    %v99 = vpop.trf.xlu0
    %v100 = vpop.trf.xlu0
    %v101 = vpop.trf.xlu0
    %vm102 = vcmask 64512
    %v104 = vsel %vm102, %v86, 0
    %v107 = vsel %vm102, %v87, 0
    %v110 = vsel %vm102, %v88, 0
    %v113 = vsel %vm102, %v89, 0
    %115 = vmatprep.subr.mxu0 0.0
    %116 = vmatpush1.msra.mxu0 %v53
    %117 = vmatprep.subr.mxu0 0.0
    %118 = vmatpush1.msra.mxu0 0.0
    %119 = vmatprep.subr.mxu0 0.0
    %120 = vmatpush1.msra.mxu0 0.0
    %121 = vmatprep.subr.mxu0 0.0
    %122 = vmatpush1.msra.mxu0 0.0
    %123 = vmatprep.subr.mxu0 0.0
    %124 = vmatpush1.msra.mxu0 0.0
    %125 = vmatprep.subr.mxu0 0.0
    %126 = vmatpush1.msra.mxu0 0.0
    %127 = vmatprep.subr.mxu0 0.0
    %128 = vmatpush1.msra.mxu0 0.0
    %129 = vmatprep.subr.mxu0 0.0
    %130 = vmatpush1.msra.mxu0 0.0
    %131 = vmatprep.subr.mxu0 0.0
    %132 = vmatpush1.msra.mxu0 0.0
    %133 = vmatprep.subr.mxu0 0.0
    %134 = vmatpush1.msra.mxu0 0.0
    %135 = vmatprep.subr.mxu0 0.0
    %136 = vmatpush1.msra.mxu0 0.0
    %137 = vmatprep.subr.mxu0 0.0
    %138 = vmatpush1.msra.mxu0 0.0
    %139 = vmatprep.subr.mxu0 0.0
    %140 = vmatpush1.msra.mxu0 0.0
    %141 = vmatprep.subr.mxu0 0.0
    %142 = vmatpush1.msra.mxu0 0.0
    %143 = vmatprep.subr.mxu0 0.0
    %144 = vmatpush1.msra.mxu0 0.0
    %145 = vmatprep.subr.mxu0 0.0
    %146 = vmatpush1.msra.mxu0 0.0
    %147 = vmatprep.subr.mxu0 0.0
    %148 = vmatpush1.msra.mxu0 0.0
    %149 = vmatprep.subr.mxu0 0.0
    %150 = vmatpush1.msra.mxu0 0.0
    %151 = vmatprep.subr.mxu0 0.0
    %152 = vmatpush1.msra.mxu0 0.0
    %153 = vmatprep.subr.mxu0 0.0
    %154 = vmatpush1.msra.mxu0 0.0
    %155 = vmatprep.subr.mxu0 0.0
    %156 = vmatpush1.msra.mxu0 0.0
    %157 = vmatprep.subr.mxu0 0.0
    %158 = vmatpush1.msra.mxu0 0.0
    %159 = vmatprep.subr.mxu0 0.0
    %160 = vmatpush1.msra.mxu0 0.0
    %161 = vmatprep.subr.mxu0 0.0
    %162 = vmatpush1.msra.mxu0 0.0
    %163 = vmatprep.subr.mxu0 0.0
    %164 = vmatpush1.msra.mxu0 0.0
    %165 = vmatprep.subr.mxu0 0.0
    %166 = vmatpush1.msra.mxu0 0.0
    %167 = vmatprep.subr.mxu0 0.0
    %168 = vmatpush1.msra.mxu0 0.0
    %169 = vmatprep.subr.mxu0 0.0
    %170 = vmatpush1.msra.mxu0 0.0
    %171 = vmatprep.subr.mxu0 0.0
    %172 = vmatpush1.msra.mxu0 0.0
    %173 = vmatprep.subr.mxu0 0.0
    %174 = vmatpush1.msra.mxu0 0.0
    %175 = vmatprep.subr.mxu0 0.0
    %176 = vmatpush1.msra.mxu0 0.0
    %177 = vmatprep.subr.mxu0 0.0
    %178 = vmatpush1.msra.mxu0 0.0
    %179 = vmatprep.mubr.f32.mxu0 0.0
    %180 = vmatmul.mubr.f32.gmra.mrb[0].mxu0 %v104
    %v181 = vpop.f32.mrb[0].mxu0
    %v182 = vadd.f32 0.0, %v181
    %v183 = vpop.f32.mrb[0].mxu0
    %184 = vmatprep.mubr.f32.mxu0 0.0
    %185 = vmatmul.mubr.f32.gmra.mrb[0].mxu0 %v107
    %v186 = vpop.f32.mrb[0].mxu0
    %v187 = vadd.f32 0.0, %v186
    %v188 = vpop.f32.mrb[0].mxu0
    %189 = vmatprep.mubr.f32.mxu0 0.0
    %190 = vmatmul.mubr.f32.gmra.mrb[0].mxu0 %v110
    %v191 = vpop.f32.mrb[0].mxu0
    %v192 = vadd.f32 0.0, %v191
    %v193 = vpop.f32.mrb[0].mxu0
    %194 = vmatprep.mubr.f32.mxu0 0.0
    %195 = vmatmul.mubr.f32.gmra.mrb[0].mxu0 %v113
    %v196 = vpop.f32.mrb[0].mxu0
    %v197 = vadd.f32 0.0, %v196
    %v198 = vpop.f32.mrb[0].mxu0
    %199 = vdwg.mxu0
    %v200 = vadd.f32 %v66, %v182
    %v201 = vadd.f32 %v67, %v187
    %v202 = vadd.f32 %v68, %v192
    %v203 = vadd.f32 %v69, %v197
    %204 = vst.msk [vmem:[#allocation8] sm:$0xff] %vm47, %v200
    %205 = vst.msk [vmem:[#allocation8 + $0x8] sm:$0xff] %vm47, %v201
    %206 = vst.msk [vmem:[#allocation8 + $0x10] sm:$0xff] %vm47, %v202
    %207 = vst.msk [vmem:[#allocation8 + $0x18] sm:$0xff] %vm47, %v203
    // Predicated region
    $region14: #{tpu_custom_call.1} parent=1 // pred_check
      _
    $region15: #{tpu_custom_call.1} parent=1 // pred_check_branch
      %209 = sbr.rel (0) target = $region17
    $region16: #{tpu_custom_call.1} parent=1 // pred_region
      %s211 = ssub.s32 128, 128
      %212 = vsyncadd [#allocation4], %s211
      %s214 = sshll.u32 [#allocation5], 4
      %s215 = int_to_ptr.vmem [resolvable:$true] %s214
      %217 = dma.vmem_to_hbm [thread:$0]  %s215, 128, %s1, [#allocation4]
    $region17: #{tpu_custom_call.1} parent=1 // pred_fallthru
      _
    // Predicated region
    $region18: #{tpu_custom_call.1} parent=1 // pred_check
      _
    $region19: #{tpu_custom_call.1} parent=1 // pred_check_branch
      %219 = sbr.rel (0) target = $region21
    $region20: #{tpu_custom_call.1} parent=1 // pred_region
      %s221 = ssub.s32 16, 16
      %222 = vsyncadd [#allocation7], %s221
      %s224 = sshll.u32 [#allocation6], 4
      %s225 = int_to_ptr.vmem [resolvable:$true] %s224
      %227 = dma.vmem_to_hbm [thread:$0]  %s225, 16, %s2, [#allocation7]
    $region21: #{tpu_custom_call.1} parent=1 // pred_fallthru
      _
    // Predicated region
    $region22: #{tpu_custom_call.1} parent=1 // pred_check
      _
    $region23: #{tpu_custom_call.1} parent=1 // pred_check_branch
      %229 = sbr.rel (0) target = $region25
    $region24: #{tpu_custom_call.1} parent=1 // pred_region
      %s231 = ssub.s32 512, 512
      %232 = vsyncadd [#allocation7], %s231
      %s233 = sshll.u32 [#allocation8], 4
      %s234 = int_to_ptr.vmem [resolvable:$true] %s233
      %239 = dma.vmem_to_hbm [thread:$0]  %s234, 512, %s3, [#allocation7], 128, 128, 8
    $region25: #{tpu_custom_call.1} parent=1 // pred_fallthru
      _
    // Predicated region
    $region26: #{tpu_custom_call.1} parent=1 // pred_check
      _
    $region27: #{tpu_custom_call.1} parent=1 // pred_check_branch
      %241 = sbr.rel (0) target = $region29
    $region28: #{tpu_custom_call.1} parent=1 // pred_region
      %242 = dma.done [#allocation4], 128
    $region29: #{tpu_custom_call.1} parent=1 // pred_fallthru
      _
    // Predicated region
    $region30: #{tpu_custom_call.1} parent=1 // pred_check
      _
    $region31: #{tpu_custom_call.1} parent=1 // pred_check_branch
      %244 = sbr.rel (0) target = $region33
    $region32: #{tpu_custom_call.1} parent=1 // pred_region
      %245 = dma.done [#allocation7], 16
    $region33: #{tpu_custom_call.1} parent=1 // pred_fallthru
      _
    // Predicated region
    $region34: #{tpu_custom_call.1} parent=1 // pred_check
      _
    $region35: #{tpu_custom_call.1} parent=1 // pred_check_branch
      %247 = sbr.rel (0) target = $region37
    $region36: #{tpu_custom_call.1} parent=1 // pred_region
      %248 = dma.done [#allocation7], 512
    $region37: #{tpu_custom_call.1} parent=1 // pred_fallthru
      _
    %249 = vsyncpa [#allocation3], 1
    %250 = vsyncpa [#allocation4], 1
    %251 = vsyncpa [#allocation7], 1

</llo_original>
